<compile_context>
chip_gen: v7x
topology: tpu7x:2x2x1
jax: 0.10.0
libtpu: 0.0.40
codegen_flags: <defaults>
</compile_context>

<pallas_src>
import functools

import jax
import jax.numpy as jnp
from jax.experimental import pallas as pl
from jax.experimental.pallas import tpu as pltpu


# --------------------------------------------------------------------------------------------
# Kernel
# --------------------------------------------------------------------------------------------
def _focal_kernel(*refs, gamma, batch, block_b, has_alpha, reduction_none):
    """One batch tile of focal loss.

    refs (has_alpha=True):  logits [TB, C] (native dtype), targets [TB, 1] i32,
                            alpha [1, C] f32, out
    refs (has_alpha=False): logits, targets, out
    out: [TB, 1] f32 per-sample values ('none') or [1, 1, 1] per-tile partial sum.
    """
    if has_alpha:
        logits_ref, targets_ref, alpha_ref, out_ref = refs
        a = alpha_ref[...].astype(jnp.float32)                      # [1, C]
    else:
        logits_ref, targets_ref, out_ref = refs
        a = None

    x = logits_ref[...]                                             # [TB, C] native dtype
    t = targets_ref[...]                                            # [TB, 1] int32
    tb, c = x.shape

    # Target "gather" via lane-iota compare; no one-hot / full log-softmax temporaries.
    hit = jax.lax.broadcasted_iota(jnp.int32, (tb, c), 1) == t      # [TB, C] bool

    # Numerically-stable logsumexp; f32 upcast is folded into the exp consumer.
    m = jnp.max(x, axis=-1, keepdims=True).astype(jnp.float32)      # [TB, 1]
    e = jnp.exp(x.astype(jnp.float32) - m)                          # [TB, C] f32 (only full temp)
    lse = m + jnp.log(jnp.sum(e, axis=-1, keepdims=True))           # [TB, 1]

    # x[i, t_i]: exact (single nonzero per row), summed in native dtype then upcast.
    x_t = jnp.sum(jnp.where(hit, x, jnp.zeros_like(x)), axis=-1,
                  keepdims=True).astype(jnp.float32)                # [TB, 1]

    ce = lse - x_t                                                  # -log_softmax(x)[t]
    if has_alpha:
        w_t = jnp.sum(jnp.where(hit, a, 0.0), axis=-1, keepdims=True)   # alpha[t_i]
        ce = w_t * ce

    pt = jnp.exp(-ce)
    base = jnp.maximum(1.0 - pt, 0.0)       # clamp: avoids NaN from pow on tiny negatives
    g = float(gamma)
    if g.is_integer() and 0.0 <= g <= 8.0:
        # Integer gamma (default 2.0): cheap VPU multiplies instead of exp/log pow on the EUP.
        factor = jnp.ones_like(base)
        for _ in range(int(g)):
            factor = factor * base
    else:
        factor = jnp.power(base, g)
    focal = factor * ce                                             # [TB, 1]

    # Mask rows beyond the true batch (ragged edge block is NOT padded on the wrapper side;
    # garbage rows only affect themselves and are zeroed here before any cross-row reduce).
    row = pl.program_id(0) * block_b + jax.lax.broadcasted_iota(jnp.int32, (tb, 1), 0)
    focal = jnp.where(row < batch, focal, 0.0)

    if reduction_none:
        out_ref[...] = focal                                        # [TB, 1] column block
    else:
        out_ref[0] = jnp.sum(focal, axis=0, keepdims=True)          # [1, 1] per-tile partial sum


# --------------------------------------------------------------------------------------------
# Tiling heuristics
# --------------------------------------------------------------------------------------------
def _pick_vmem_limit_bytes():
    """Chip-generation-aware VMEM limit: 96 MiB on 128-MiB v5e/v6e, <=48 MiB on 64-MiB v7x."""
    try:
        cap = int(pltpu.get_tpu_info().vmem_capacity_bytes)
    except Exception:
        cap = 64 * 1024 * 1024                                      # conservative (v7x-sized)
    if cap >= 128 * 1024 * 1024:
        return 96 * 1024 * 1024
    return min(max(cap - 16 * 1024 * 1024, 32 * 1024 * 1024), 48 * 1024 * 1024)


def _auto_block_rows(num_classes, dtype_bytes, vmem_limit_bytes):
    """Rows per tile from the real working set: double-buffered native-dtype input tile plus
    ~3 full-width f32 temporaries per row, against ~75% of the VMEM limit."""
    c = max(int(num_classes), 1)
    per_row = 2 * c * dtype_bytes + 3 * c * 4 + 64
    budget = (vmem_limit_bytes * 3) // 4
    rows = budget // per_row
    return int(max(8, min(rows, 4096)))


# --------------------------------------------------------------------------------------------
# Wrapper
# --------------------------------------------------------------------------------------------
def focal_loss_ce(logits, targets, alpha=None, gamma=2.0, reduction="mean", block_b=None):
    """JAX/Pallas equivalent of FocalLossCE(alpha, gamma, reduction)(logits, targets).

    logits keep their native dtype in HBM (no wrapper-side f32 upcast); all math is f32
    inside the kernel.  Results are returned in float32.
    """
    B, C = logits.shape
    targets_2d = targets.reshape(B, 1).astype(jnp.int32)
    has_alpha = alpha is not None

    dtype_bytes = jnp.dtype(logits.dtype).itemsize
    align = 8 * max(1, 4 // dtype_bytes)          # sublane packing: 8 f32, 16 bf16, 32 int8
    vmem_limit = _pick_vmem_limit_bytes()

    tb = _auto_block_rows(C, dtype_bytes, vmem_limit) if block_b is None else int(block_b)
    if tb >= B:
        if B >= 4 * align:
            # Split a single-tile batch in two so both v7x TensorCores get work.
            tb = (((B + 1) // 2) + align - 1) // align * align
        else:
            tb = B                                # single tile == full dim (no alignment needed)
    else:
        tb = max(align, (tb // align) * align)
    num_blocks = int(pl.cdiv(B, tb))              # ragged edge masked in-kernel (no pad copy)

    in_specs = [
        pl.BlockSpec((tb, C), lambda i: (i, 0)),  # logits tile, native dtype
        pl.BlockSpec((tb, 1), lambda i: (i, 0)),  # targets column (i32)
    ]
    operands = [logits, targets_2d]
    if has_alpha:
        alpha_2d = jnp.asarray(alpha, dtype=jnp.float32).reshape(1, C)
        in_specs.append(pl.BlockSpec((1, C), lambda i: (0, 0)))   # resident across the grid
        operands.append(alpha_2d)

    compiler_params = pltpu.CompilerParams(
        dimension_semantics=("parallel",),        # independent batch tiles
        vmem_limit_bytes=vmem_limit,
    )
    kernel = functools.partial(
        _focal_kernel, gamma=float(gamma), batch=B, block_b=tb,
        has_alpha=has_alpha, reduction_none=(reduction not in ("mean", "sum")))

    if reduction in ("mean", "sum"):
        # Only per-tile partial sums go back to HBM.
        partial_sums = pl.pallas_call(
            kernel,
            out_shape=jax.ShapeDtypeStruct((num_blocks, 1, 1), jnp.float32),
            grid=(num_blocks,),
            in_specs=in_specs,
            out_specs=pl.BlockSpec((1, 1, 1), lambda i: (i, 0, 0)),
            compiler_params=compiler_params,
        )(*operands)
        total = jnp.sum(partial_sums)
        return total / B if reduction == "mean" else total

    # reduction == 'none': per-sample values as a column; edge-block OOB writes are dropped.
    per_sample = pl.pallas_call(
        kernel,
        out_shape=jax.ShapeDtypeStruct((B, 1), jnp.float32),
        grid=(num_blocks,),
        in_specs=in_specs,
        out_specs=pl.BlockSpec((tb, 1), lambda i: (i, 0)),
        compiler_params=compiler_params,
    )(*operands)
    return per_sample[:, 0]


# --------------------------------------------------------------------------------------------
# Pure-JAX reference + self-test
# --------------------------------------------------------------------------------------------
def _focal_loss_ref(logits, targets, alpha, gamma, reduction="mean"):
    logp = jax.nn.log_softmax(logits.astype(jnp.float32), axis=-1)
    logp_t = jnp.take_along_axis(logp, targets[:, None].astype(jnp.int32), axis=-1)[:, 0]
    w_t = alpha[targets] if alpha is not None else jnp.ones_like(logp_t)
    ce = -w_t * logp_t
    pt = jnp.exp(-ce)
    focal = ((1.0 - pt) ** gamma) * ce
    if reduction == "mean":
        return focal.mean()
    if reduction == "sum":
        return focal.sum()
    return focal


if __name__ == "__main__":
    gamma = 2.0
    key = jax.random.PRNGKey(0)
    k1, k2, k3, k4 = jax.random.split(key, 4)

    # Case 1: small f32 problem, auto tile path, weighted and unweighted (alpha=None fast path).
    B1, C1 = 8, 16
    logits1 = jax.random.normal(k1, (B1, C1), dtype=jnp.float32)
    targets1 = jax.random.randint(k2, (B1,), 0, C1, dtype=jnp.int32)
    alpha1 = jnp.linspace(0.5, 1.5, C1, dtype=jnp.float32)

    out1 = jax.block_until_ready(focal_loss_ce(logits1, targets1, alpha1, gamma, "mean"))
    ref1 = _focal_loss_ref(logits1, targets1, alpha1, gamma, "mean")
    assert jnp.allclose(out1, ref1, rtol=1e-5, atol=1e-6), (out1, ref1)

    out1b = jax.block_until_ready(focal_loss_ce(logits1, targets1, None, gamma, "sum"))
    ref1b = _focal_loss_ref(logits1, targets1, None, gamma, "sum")
    assert jnp.allclose(out1b, ref1b, rtol=1e-5, atol=1e-6), (out1b, ref1b)

    # Case 2: bf16 logits (native dtype into the kernel), forced multi-tile grid with a ragged
    # edge block (no wrapper pad), all three reductions.
    B2, C2 = 300, 24
    logits2 = jax.random.normal(k3, (B2, C2), dtype=jnp.float32).astype(jnp.bfloat16)
    targets2 = jax.random.randint(k4, (B2,), 0, C2, dtype=jnp.int32)
    alpha2 = jnp.linspace(0.25, 2.0, C2, dtype=jnp.float32)

    for red in ("mean", "sum", "none"):
        out = jax.block_until_ready(
            focal_loss_ce(logits2, targets2, alpha2, gamma, red, block_b=64))
        ref = _focal_loss_ref(logits2, targets2, alpha2, gamma, red)
        assert jnp.allclose(out, ref, rtol=1e-4, atol=1e-5), (red, out, ref)

    print("KERNEL_OK")
</pallas_src>

<mosaic_0001>
module attributes {stable_mosaic.version = 11 : i64} {
  func.func @_focal_kernel(%arg0: i32, %arg1: memref<8x16xf32, #tpu.memory_space<vmem>>, %arg2: memref<8x1xi32, #tpu.memory_space<vmem>>, %arg3: memref<1x16xf32, #tpu.memory_space<vmem>>, %arg4: memref<1x1x1xf32, #tpu.memory_space<vmem>>) attributes {dimension_semantics = [#tpu.dimension_semantics<parallel>], iteration_bounds = array<i64: 1>, scalar_prefetch = 0 : i64, scratch_operands = 0 : i64, tpu.core_type = #tpu.core_type<tc>, window_params = [{transform_indices = @transform_0, window_bounds = array<i64: 8, 16>}, {transform_indices = @transform_1, window_bounds = array<i64: 8, 1>}, {pipeline_mode = #tpu.pipeline_mode<synchronous>, transform_indices = @transform_2, window_bounds = array<i64: 1, 16>}, {transform_indices = @transform_3, window_bounds = array<i64: 1, 1, 1>}]} {
    %c0 = arith.constant 0 : index
    %c0_0 = arith.constant 0 : index
    %0 = vector.load %arg3[%c0, %c0_0] : memref<1x16xf32, #tpu.memory_space<vmem>>, vector<1x16xf32>
    %c0_1 = arith.constant 0 : index
    %c0_2 = arith.constant 0 : index
    %1 = vector.load %arg1[%c0_1, %c0_2] : memref<8x16xf32, #tpu.memory_space<vmem>>, vector<8x16xf32>
    %c0_3 = arith.constant 0 : index
    %c0_4 = arith.constant 0 : index
    %2 = vector.load %arg2[%c0_3, %c0_4] : memref<8x1xi32, #tpu.memory_space<vmem>>, vector<8x1xi32>
    %3 = tpu.iota {dimensions = array<i32: 1>} : vector<8x16xi32>
    %4 = vector.broadcast %2 : vector<8x1xi32> to vector<8x16xi32>
    %5 = arith.cmpi eq, %3, %4 : vector<8x16xi32>
    %cst = arith.constant dense<0xFF800000> : vector<8xf32>
    %6 = vector.multi_reduction <maximumf>, %1, %cst [1] : vector<8x16xf32> to vector<8xf32>
    %7 = vector.shape_cast %6 : vector<8xf32> to vector<8x1xf32>
    %8 = vector.broadcast %7 : vector<8x1xf32> to vector<8x16xf32>
    %9 = arith.subf %1, %8 : vector<8x16xf32>
    %10 = math.exp %9 : vector<8x16xf32>
    %cst_5 = arith.constant dense<0.000000e+00> : vector<8xf32>
    %11 = vector.multi_reduction <add>, %10, %cst_5 [1] : vector<8x16xf32> to vector<8xf32>
    %12 = vector.shape_cast %11 : vector<8xf32> to vector<8x1xf32>
    %13 = math.log %12 : vector<8x1xf32>
    %14 = arith.addf %7, %13 : vector<8x1xf32>
    %cst_6 = arith.constant 0.000000e+00 : f32
    %15 = vector.broadcast %cst_6 : f32 to vector<8x16xf32>
    %16 = arith.select %5, %1, %15 : vector<8x16xi1>, vector<8x16xf32>
    %cst_7 = arith.constant dense<0.000000e+00> : vector<8xf32>
    %17 = vector.multi_reduction <add>, %16, %cst_7 [1] : vector<8x16xf32> to vector<8xf32>
    %18 = vector.shape_cast %17 : vector<8xf32> to vector<8x1xf32>
    %19 = arith.subf %14, %18 : vector<8x1xf32>
    %cst_8 = arith.constant 0.000000e+00 : f32
    %20 = vector.shape_cast %0 : vector<1x16xf32> to vector<1x16xf32>
    %21 = vector.broadcast %20 : vector<1x16xf32> to vector<8x16xf32>
    %22 = vector.broadcast %cst_8 : f32 to vector<8x16xf32>
    %23 = arith.select %5, %21, %22 : vector<8x16xi1>, vector<8x16xf32>
    %cst_9 = arith.constant dense<0.000000e+00> : vector<8xf32>
    %24 = vector.multi_reduction <add>, %23, %cst_9 [1] : vector<8x16xf32> to vector<8xf32>
    %25 = vector.shape_cast %24 : vector<8xf32> to vector<8x1xf32>
    %26 = arith.mulf %25, %19 : vector<8x1xf32>
    %cst_10 = arith.constant 0.000000e+00 : f32
    %27 = vector.broadcast %cst_10 : f32 to vector<8x1xf32>
    %28 = arith.subf %27, %26 : vector<8x1xf32>
    %29 = math.exp %28 : vector<8x1xf32>
    %cst_11 = arith.constant 1.000000e+00 : f32
    %30 = vector.broadcast %cst_11 : f32 to vector<8x1xf32>
    %31 = arith.subf %30, %29 : vector<8x1xf32>
    %cst_12 = arith.constant 0.000000e+00 : f32
    %32 = vector.broadcast %cst_12 : f32 to vector<8x1xf32>
    %33 = arith.maximumf %31, %32 : vector<8x1xf32>
    %cst_13 = arith.constant 1.000000e+00 : f32
    %34 = vector.broadcast %cst_13 : f32 to vector<8x1xf32>
    %35 = arith.mulf %34, %33 : vector<8x1xf32>
    %36 = arith.mulf %35, %33 : vector<8x1xf32>
    %37 = arith.mulf %36, %26 : vector<8x1xf32>
    %c8_i32 = arith.constant 8 : i32
    %38 = arith.muli %arg0, %c8_i32 : i32
    %39 = tpu.iota {dimensions = array<i32: 0>} : vector<8x1xi32>
    %40 = vector.broadcast %38 : i32 to vector<8x1xi32>
    %41 = arith.addi %40, %39 : vector<8x1xi32>
    %c8_i32_14 = arith.constant 8 : i32
    %42 = vector.broadcast %c8_i32_14 : i32 to vector<8x1xi32>
    %43 = arith.cmpi slt, %41, %42 : vector<8x1xi32>
    %cst_15 = arith.constant 0.000000e+00 : f32
    %44 = vector.broadcast %cst_15 : f32 to vector<8x1xf32>
    %45 = arith.select %43, %37, %44 : vector<8x1xi1>, vector<8x1xf32>
    %cst_16 = arith.constant dense<0.000000e+00> : vector<1xf32>
    %46 = vector.multi_reduction <add>, %45, %cst_16 [0] : vector<8x1xf32> to vector<1xf32>
    %47 = vector.shape_cast %46 : vector<1xf32> to vector<1x1xf32>
    %c0_17 = arith.constant 0 : index
    %c0_18 = arith.constant 0 : index
    %c0_19 = arith.constant 0 : index
    %48 = vector.load %arg4[%c0_17, %c0_18, %c0_19] : memref<1x1x1xf32, #tpu.memory_space<vmem>>, vector<1x1x1xf32>
    %49 = vector.shape_cast %48 : vector<1x1x1xf32> to vector<1x1xf32>
    %50 = vector.shape_cast %47 : vector<1x1xf32> to vector<1x1x1xf32>
    tpu.vector_store %arg4[%c0_17, %c0_18, %c0_19], %50 {strides = array<i32>} : memref<1x1x1xf32, #tpu.memory_space<vmem>>, vector<1x1x1xf32>,
    return
  }
  func.func @transform_0(%arg0: i32) -> (i32, i32) {
    %c0_i32 = arith.constant 0 : i32
    %c0_i32_0 = arith.constant 0 : i32
    return %arg0, %c0_i32 : i32, i32
  }
  func.func @transform_1(%arg0: i32) -> (i32, i32) {
    %c0_i32 = arith.constant 0 : i32
    %c0_i32_0 = arith.constant 0 : i32
    return %arg0, %c0_i32 : i32, i32
  }
  func.func @transform_2(%arg0: i32) -> (i32, i32) {
    %c0_i32 = arith.constant 0 : i32
    %c0_i32_0 = arith.constant 0 : i32
    %c0_i32_1 = arith.constant 0 : i32
    return %c0_i32, %c0_i32_0 : i32, i32
  }
  func.func @transform_3(%arg0: i32) -> (i32, i32, i32) {
    %c0_i32 = arith.constant 0 : i32
    %c0_i32_0 = arith.constant 0 : i32
    %c0_i32_1 = arith.constant 0 : i32
    return %arg0, %c0_i32, %c0_i32_0 : i32, i32, i32
  }
}

</mosaic_0001>

<llo_original>
// kernel: tpu_custom_call.1
$region0: #{tpu_custom_call.1}
  #allocation0 [shape = 'u32[]', space=smem, size = 0x4, offset = 0x4, fixed_abs, tag = 'smem constant byte address 0x4 - core index']
  #allocation1 [shape = 'u32[144,128]{1,0:T(1,128)}', space=vmem, size = 0x12000, scoped, tag = 'internal scratch']
  %s0 = inlined_call_operand.vmem [shape: f32[8,16], index: 0, kind: input, shape index: {}]
  %s1 = inlined_call_operand.vmem [shape: s32[8,1], index: 1, kind: input, shape index: {}]
  %s2 = inlined_call_operand.vmem [shape: f32[1,16], index: 2, kind: input, shape index: {}]
  %s3 = inlined_call_operand.hbm [shape: f32[1,1,1], index: 3, kind: output, shape index: {}]
  %s4 = sld [smem:[#allocation0]]
  $region22: #{tpu_custom_call.1} parent=0
    _
  %s6 = ssub.s32 1, %s4
  %s7 = scalar_select 0, %s6, %s4
  $region1: #{tpu_custom_call.1} parent=0
    #allocation2 [shape = 'u8[512]{0}', space=vmem, size = 0x400, scoped, tag = 'output window, operand 0, single buffered']
    #allocation3 [shape = 's32[1]{0}', space=sflag, size = 0x4, scoped, tag = 'scoped memory for tpu_custom_call.1']
    %8 = vsyncpa [#allocation3], 0
    // Predicated region
    $region2: #{tpu_custom_call.1} parent=1 // pred_check
      _
    $region3: #{tpu_custom_call.1} parent=1 // pred_check_branch
      %10 = sbr.rel (0) target = $region5
    $region4: #{tpu_custom_call.1} parent=1 // pred_region
      _
    $region5: #{tpu_custom_call.1} parent=1 // pred_fallthru
      _
    // Predicated region
    $region6: #{tpu_custom_call.1} parent=1 // pred_check
      _
    $region7: #{tpu_custom_call.1} parent=1 // pred_check_branch
      %12 = sbr.rel (0) target = $region9
    $region8: #{tpu_custom_call.1} parent=1 // pred_region
      _
    $region9: #{tpu_custom_call.1} parent=1 // pred_fallthru
      _
    // Predicated region
    $region10: #{tpu_custom_call.1} parent=1 // pred_check
      _
    $region11: #{tpu_custom_call.1} parent=1 // pred_check_branch
      %14 = sbr.rel (0) target = $region13
    $region12: #{tpu_custom_call.1} parent=1 // pred_region
      _
    $region13: #{tpu_custom_call.1} parent=1 // pred_fallthru
      _
    %v15 = vld [vmem:[%s2] sm:$0x1]
    %v16 = vld [vmem:[%s0] sm:$0xff]
    %v17 = vld [vmem:[%s1] sm:$0xff]
    %v18 = vlaneseq
    %v19 = vand.u32 %v18, 127
    %20 = vset.pattern.permute.xlu0 0
    %21 = vperm.xlu0 %20, %v17
    %v22 = vpop.permute.xlu0 %21
    %vm23 = vcmp.eq.s32.totalorder %v19, %v22
    %vm24 = vcmask 130048
    %v25 = vsel %vm24, %v16, -inf
    %26 = vmax.xlane.f32.xlu0 %v25
    %v27 = vpop.xlane.xlu0 %26
    %v28 = vsub.f32 %v16, %v27
    %v29 = vmul.f32 %v28, 1.442695
    %v30 = vpow.pop %v29
    %v31 = vsel %vm24, %v30, 0.0
    %32 = vadd.xlane.f32.xlu0 %v31
    %v33 = vpop.xlane.xlu0 %32
    %v34 = vlog2.pop %v33
    %v35 = vmul.f32 %v34, 0.6931472
    %v36 = vadd.f32 %v27, %v35
    %v37 = vsel %vm23, %v16, 0.0
    %v38 = vsel %vm24, %v37, 0.0
    %39 = vadd.xlane.f32.xlu0 %v38
    %v40 = vpop.xlane.xlu0 %39
    %v41 = vsub.f32 %v36, %v40
    %v43 = vlaneseq
    %v44 = vshrl.u32 %v43, 7
    %v45 = vsub.s32 0, %v44
    %v46 = vrot.slane %v15, %v45
    %v48 = vsel %vm23, %v46, 0.0
    %v49 = vsel %vm24, %v48, 0.0
    %50 = vadd.xlane.f32.xlu0 %v49
    %v51 = vpop.xlane.xlu0 %50
    %v52 = vmul.f32 %v51, %v41
    %v53 = vsub.f32 0.0, %v52
    %v54 = vmul.f32 %v53, 1.442695
    %v55 = vpow.pop %v54
    %v56 = vsub.f32 1.0, %v55
    %v57 = vmax.f32 %v56, 0.0
    %v58 = vmul.f32 %v57, %v57
    %v59 = vmul.f32 %v58, %v52
    %s60 = smul.u32 0, 8
    %v61 = vlaneseq
    %v62 = vshrl.u32 %v61, 7
    %v63 = vstv %s60
    %v64 = vadd.s32 %v63, %v62
    %vm65 = vcmp.lt.s32.totalorder %v64, 8
    %v66 = vsel %vm65, %v59, 0.0
    %v67 = vrot.slane %v66, 4
    %v68 = vadd.f32 %v66, %v67
    %v69 = vrot.slane %v68, 2
    %v70 = vadd.f32 %v68, %v69
    %v71 = vrot.slane %v70, 1
    %v72 = vadd.f32 %v70, %v71
    %vm73 = vcmask 0
    %74 = vst.msk [vmem:[#allocation2] sm:$0x1] %vm73, %v72
    // Predicated region
    $region14: #{tpu_custom_call.1} parent=1 // pred_check
      _
    $region15: #{tpu_custom_call.1} parent=1 // pred_check_branch
      %76 = sbr.rel (0) target = $region17
    $region16: #{tpu_custom_call.1} parent=1 // pred_region
      %s78 = ssub.s32 16, 16
      %79 = vsyncadd [#allocation3], %s78
      %s81 = sshll.u32 [#allocation2], 4
      %s82 = int_to_ptr.vmem [resolvable:$true] %s81
      %84 = dma.vmem_to_hbm [thread:$0]  %s82, 16, %s3, [#allocation3]
    $region17: #{tpu_custom_call.1} parent=1 // pred_fallthru
      _
    // Predicated region
    $region18: #{tpu_custom_call.1} parent=1 // pred_check
      _
    $region19: #{tpu_custom_call.1} parent=1 // pred_check_branch
      %86 = sbr.rel (0) target = $region21
    $region20: #{tpu_custom_call.1} parent=1 // pred_region
      %87 = dma.done [#allocation3], 16
    $region21: #{tpu_custom_call.1} parent=1 // pred_fallthru
      _
    %88 = vsyncpa [#allocation3], 1

</llo_original>
